<compile_context>
chip_gen: v6e
topology: v6e:2x2x1
jax: 0.10.0
libtpu: 0.0.40
codegen_flags: <defaults>
</compile_context>

<pallas_src>
import functools

import jax
import jax.numpy as jnp
from jax.experimental import pallas as pl
from jax.experimental.pallas import tpu as pltpu


def _raw_feature_kernel(x_ref, w_ref, b_ref, o_ref, *, negative_slope):
    # x_ref: (TILE_N, Ktot), w_ref: (Ktot, Fout), b_ref: (1, Fout), o_ref: (TILE_N, Fout)
    x = x_ref[...]
    w = w_ref[...]
    # Folded per-bin Conv3d == one dense matmul on the MXU (f32 accumulation).
    y = jnp.dot(x, w, preferred_element_type=jnp.float32)      # (TILE_N, Fout) f32
    y = y + b_ref[...]                                          # bias broadcast over rows
    # LeakyReLU (Dropout3d is identity in eval mode).
    y = jnp.where(y >= 0, y, negative_slope * y)
    o_ref[...] = y.astype(o_ref.dtype)


def _choose_tile_n(n, tile_n):
    if n <= tile_n:
        return n                      # single full-array block (always legal)
    return max(8, (tile_n // 8) * 8)  # 8-row aligned when actually tiling


def raw_feature_model(x, weights, biases, *, maxpool_size, time_slice_interval,
                      subwindow_size, negative_slope, tile_n=1024, use_bf16=False):
    """x: (N, 1, signal_window_size, 8, 8); weights: (nbins, F, K); biases: (nbins, F)."""
    N = x.shape[0]
    out_dtype = x.dtype

    # --- glue: time slicing + spatial maxpool (one fused XLA pass, no transposes) ---
    if time_slice_interval > 1:
        x = x[:, :, ::time_slice_interval, :, :]
    T = x.shape[2]
    sp = 8 // maxpool_size
    if maxpool_size > 1:
        x = x.reshape(N, 1, T, sp, maxpool_size, sp, maxpool_size).max(axis=(4, 6))

    nbins = T // subwindow_size
    K = subwindow_size * sp * sp
    F = weights.shape[1]
    Ktot = nbins * K
    Fout = F * nbins

    # Flattening (N, 1, T, sp, sp) -> (N, nbins*K) is already bin-major along K:
    # no input transpose required.
    xflat = x.reshape(N, Ktot)

    # Block-diagonal weight with output columns in PyTorch flatten order
    # (filter slowest, bin fastest):  W[b*K + k, f*nbins + b] = weights[b, f, k]
    wt = jnp.transpose(weights, (0, 2, 1))                        # (nbins, K, F)
    eye = jnp.eye(nbins, dtype=weights.dtype)                     # (nbins, nbins)
    w_big = (wt[:, :, :, None] * eye[:, None, None, :]).reshape(Ktot, Fout)
    # bias_flat[f*nbins + b] = biases[b, f]
    bias_flat = jnp.transpose(biases, (1, 0)).reshape(1, Fout).astype(jnp.float32)

    compute_dtype = jnp.bfloat16 if use_bf16 else xflat.dtype
    xflat = xflat.astype(compute_dtype)
    w_big = w_big.astype(compute_dtype)

    tn = _choose_tile_n(N, tile_n)
    grid = (pl.cdiv(N, tn),)

    out = pl.pallas_call(
        functools.partial(_raw_feature_kernel, negative_slope=negative_slope),
        out_shape=jax.ShapeDtypeStruct((N, Fout), out_dtype),
        grid=grid,
        in_specs=[
            pl.BlockSpec((tn, Ktot), lambda i: (i, 0)),    # batch-tiled activations
            pl.BlockSpec((Ktot, Fout), lambda i: (0, 0)),  # grid-invariant weight
            pl.BlockSpec((1, Fout), lambda i: (0, 0)),     # grid-invariant bias
        ],
        out_specs=pl.BlockSpec((tn, Fout), lambda i: (i, 0)),
        compiler_params=pltpu.CompilerParams(
            dimension_semantics=("parallel",),
        ),
    )(xflat, w_big, bias_flat)

    # Output is already (N, F*nbins) in PyTorch flatten(1) order.
    return out


def _reference(x, weights, biases, *, maxpool_size, time_slice_interval,
               subwindow_size, negative_slope):
    """Pure-JAX reference mirroring the PyTorch forward (eval mode)."""
    N = x.shape[0]
    if time_slice_interval > 1:
        x = x[:, :, ::time_slice_interval, :, :]
    T = x.shape[2]
    sp = 8 // maxpool_size
    if maxpool_size > 1:
        x = x.reshape(N, 1, T, sp, maxpool_size, sp, maxpool_size).max(axis=(4, 6))
    nbins = T // subwindow_size
    K = subwindow_size * sp * sp
    F = weights.shape[1]
    xb = x[:, 0].reshape(N, nbins, subwindow_size, sp, sp)
    xb = jnp.transpose(xb, (1, 0, 2, 3, 4)).reshape(nbins, N, K)
    y = jnp.einsum("bnk,bfk->bnf", xb, weights) + biases[:, None, :]
    y = jnp.where(y >= 0, y, negative_slope * y)
    # PyTorch: x_new (N, F, nbins, 1, 1); flatten(1) -> (N, F*nbins), F slow / bin fast.
    return jnp.transpose(y, (1, 2, 0)).reshape(N, F * nbins)


if __name__ == "__main__":
    # args.* values (consistent with module asserts: powers of 2, etc.)
    signal_window_size = 16
    mf_time_slice_interval = 1
    mf_maxpool_size = 2
    subwindow_size = 8            # -> time_points=16, subwindow_nbins=2
    raw_num_filters = 16
    mf_negative_slope = 0.02

    time_points = signal_window_size // mf_time_slice_interval
    nbins = time_points // subwindow_size
    sp = 8 // mf_maxpool_size
    K = subwindow_size * sp * sp  # 8 * 4 * 4 = 128

    N = 16
    key = jax.random.PRNGKey(0)
    kx, kw, kb = jax.random.split(key, 3)
    x = jax.random.normal(kx, (N, 1, signal_window_size, 8, 8), dtype=jnp.float32)

    # Conv3d-like params: one (F, 1, sws, sp, sp) filter per bin, flattened to
    # (nbins, F, K); uniform(-1/sqrt(K), 1/sqrt(K)) like PyTorch default init.
    bound = 1.0 / float(K) ** 0.5
    weights = jax.random.uniform(kw, (nbins, raw_num_filters, K),
                                 dtype=jnp.float32, minval=-bound, maxval=bound)
    biases = jax.random.uniform(kb, (nbins, raw_num_filters),
                                dtype=jnp.float32, minval=-bound, maxval=bound)

    kwargs = dict(maxpool_size=mf_maxpool_size,
                  time_slice_interval=mf_time_slice_interval,
                  subwindow_size=subwindow_size,
                  negative_slope=mf_negative_slope)

    ref = _reference(x, weights, biases, **kwargs)
    assert ref.shape == (N, raw_num_filters * nbins), ref.shape

    # 1) f32, single batch tile (default tile_n >= N)
    out1 = jax.block_until_ready(raw_feature_model(x, weights, biases, **kwargs))
    assert out1.shape == ref.shape, out1.shape
    assert jnp.allclose(out1, ref, atol=1e-5, rtol=1e-5)

    # 2) f32, batch-tiled grid (exercises the parallel N axis)
    out2 = jax.block_until_ready(
        raw_feature_model(x, weights, biases, tile_n=8, **kwargs))
    assert jnp.allclose(out2, ref, atol=1e-5, rtol=1e-5)

    # 3) bf16 operands with f32 accumulation (memory-bound fast path)
    out3 = jax.block_until_ready(
        raw_feature_model(x, weights, biases, tile_n=8, use_bf16=True, **kwargs))
    assert jnp.allclose(out3, ref, atol=5e-2, rtol=5e-2)

    print("KERNEL_OK")
</pallas_src>

<mosaic_0001>
module attributes {stable_mosaic.version = 11 : i64} {
  func.func @_raw_feature_kernel(%arg0: i32, %arg1: memref<16x256xf32, #tpu.memory_space<vmem>>, %arg2: memref<256x32xf32, #tpu.memory_space<vmem>>, %arg3: memref<1x32xf32, #tpu.memory_space<vmem>>, %arg4: memref<16x32xf32, #tpu.memory_space<vmem>>) attributes {dimension_semantics = [#tpu.dimension_semantics<parallel>], iteration_bounds = array<i64: 1>, scalar_prefetch = 0 : i64, scratch_operands = 0 : i64, tpu.core_type = #tpu.core_type<tc>, window_params = [{transform_indices = @transform_0, window_bounds = array<i64: 16, 256>}, {pipeline_mode = #tpu.pipeline_mode<synchronous>, transform_indices = @transform_1, window_bounds = array<i64: 256, 32>}, {pipeline_mode = #tpu.pipeline_mode<synchronous>, transform_indices = @transform_2, window_bounds = array<i64: 1, 32>}, {transform_indices = @transform_3, window_bounds = array<i64: 16, 32>}]} {
    %c0 = arith.constant 0 : index
    %c0_0 = arith.constant 0 : index
    %0 = vector.load %arg1[%c0, %c0_0] : memref<16x256xf32, #tpu.memory_space<vmem>>, vector<16x256xf32>
    %c0_1 = arith.constant 0 : index
    %c0_2 = arith.constant 0 : index
    %1 = vector.load %arg2[%c0_1, %c0_2] : memref<256x32xf32, #tpu.memory_space<vmem>>, vector<256x32xf32>
    %cst = arith.constant dense<0.000000e+00> : vector<16x32xf32>
    %2 = tpu.matmul %0, %1, %cst {dimension_numbers = #tpu.dot_dimension_numbers<[1], [0], [0], [1], [0, 0, 1, 1], [], []>} : vector<16x256xf32>, vector<256x32xf32>, vector<16x32xf32> -> vector<16x32xf32>
    %c0_3 = arith.constant 0 : index
    %c0_4 = arith.constant 0 : index
    %3 = vector.load %arg3[%c0_3, %c0_4] : memref<1x32xf32, #tpu.memory_space<vmem>>, vector<1x32xf32>
    %4 = vector.broadcast %3 : vector<1x32xf32> to vector<16x32xf32>
    %5 = arith.addf %2, %4 : vector<16x32xf32>
    %cst_5 = arith.constant 0.000000e+00 : f32
    %6 = vector.broadcast %cst_5 : f32 to vector<16x32xf32>
    %7 = arith.cmpf oge, %5, %6 : vector<16x32xf32>
    %cst_6 = arith.constant 2.000000e-02 : f32
    %8 = vector.broadcast %cst_6 : f32 to vector<16x32xf32>
    %9 = arith.mulf %8, %5 : vector<16x32xf32>
    %10 = arith.select %7, %5, %9 : vector<16x32xi1>, vector<16x32xf32>
    %c0_7 = arith.constant 0 : index
    %c0_8 = arith.constant 0 : index
    %11 = vector.load %arg4[%c0_7, %c0_8] : memref<16x32xf32, #tpu.memory_space<vmem>>, vector<16x32xf32>
    tpu.vector_store %arg4[%c0_7, %c0_8], %10 {strides = array<i32>} : memref<16x32xf32, #tpu.memory_space<vmem>>, vector<16x32xf32>,
    return
  }
  func.func @transform_0(%arg0: i32) -> (i32, i32) {
    %c0_i32 = arith.constant 0 : i32
    %c0_i32_0 = arith.constant 0 : i32
    return %arg0, %c0_i32 : i32, i32
  }
  func.func @transform_1(%arg0: i32) -> (i32, i32) {
    %c0_i32 = arith.constant 0 : i32
    %c0_i32_0 = arith.constant 0 : i32
    %c0_i32_1 = arith.constant 0 : i32
    return %c0_i32, %c0_i32_0 : i32, i32
  }
  func.func @transform_2(%arg0: i32) -> (i32, i32) {
    %c0_i32 = arith.constant 0 : i32
    %c0_i32_0 = arith.constant 0 : i32
    %c0_i32_1 = arith.constant 0 : i32
    return %c0_i32, %c0_i32_0 : i32, i32
  }
  func.func @transform_3(%arg0: i32) -> (i32, i32) {
    %c0_i32 = arith.constant 0 : i32
    %c0_i32_0 = arith.constant 0 : i32
    return %arg0, %c0_i32 : i32, i32
  }
}

</mosaic_0001>

<llo_original>
// kernel: tpu_custom_call.1
$region0: #{tpu_custom_call.1}
  #allocation0 [shape = 'u32[]', space=smem, size = 0x4, offset = 0x4, fixed_abs, tag = 'smem constant byte address 0x4 - core index']
  #allocation1 [shape = 'u32[144,128]{1,0:T(1,128)}', space=vmem, size = 0x12000, scoped, tag = 'internal scratch']
  %s0 = inlined_call_operand.vmem [shape: f32[16,256], index: 0, kind: input, shape index: {}]
  %s1 = inlined_call_operand.vmem [shape: f32[256,32], index: 1, kind: input, shape index: {}]
  %s2 = inlined_call_operand.vmem [shape: f32[1,32], index: 2, kind: input, shape index: {}]
  %s3 = inlined_call_operand.hbm [shape: f32[16,32], index: 3, kind: output, shape index: {}]
  %s4 = sld [smem:[#allocation0]]
  $region22: #{tpu_custom_call.1} parent=0
    _
  %s6 = ssub.s32 1, %s4
  %s7 = scalar_select 0, %s6, %s4
  $region1: #{tpu_custom_call.1} parent=0
    #allocation2 [shape = 'u8[8192]{0}', space=vmem, size = 0x2000, scoped, tag = 'output window, operand 0, single buffered']
    #allocation3 [shape = 's32[1]{0}', space=sflag, size = 0x4, scoped, tag = 'scoped memory for tpu_custom_call.1']
    %8 = vsyncpa [#allocation3], 0
    // Predicated region
    $region2: #{tpu_custom_call.1} parent=1 // pred_check
      _
    $region3: #{tpu_custom_call.1} parent=1 // pred_check_branch
      %10 = sbr.rel (0) target = $region5
    $region4: #{tpu_custom_call.1} parent=1 // pred_region
      _
    $region5: #{tpu_custom_call.1} parent=1 // pred_fallthru
      _
    // Predicated region
    $region6: #{tpu_custom_call.1} parent=1 // pred_check
      _
    $region7: #{tpu_custom_call.1} parent=1 // pred_check_branch
      %12 = sbr.rel (0) target = $region9
    $region8: #{tpu_custom_call.1} parent=1 // pred_region
      _
    $region9: #{tpu_custom_call.1} parent=1 // pred_fallthru
      _
    // Predicated region
    $region10: #{tpu_custom_call.1} parent=1 // pred_check
      _
    $region11: #{tpu_custom_call.1} parent=1 // pred_check_branch
      %14 = sbr.rel (0) target = $region13
    $region12: #{tpu_custom_call.1} parent=1 // pred_region
      _
    $region13: #{tpu_custom_call.1} parent=1 // pred_fallthru
      _
    %v15 = vld [vmem:[%s0] sm:$0xff]
    %v16 = vld [vmem:[%s0 + $0x8] sm:$0xff]
    %v17 = vld [vmem:[%s0 + $0x10] sm:$0xff]
    %v18 = vld [vmem:[%s0 + $0x18] sm:$0xff]
    %v19 = vld [vmem:[%s1] sm:$0xff]
    %v20 = vld [vmem:[%s1 + $0x8] sm:$0xff]
    %v21 = vld [vmem:[%s1 + $0x10] sm:$0xff]
    %v22 = vld [vmem:[%s1 + $0x18] sm:$0xff]
    %v23 = vld [vmem:[%s1 + $0x20] sm:$0xff]
    %v24 = vld [vmem:[%s1 + $0x28] sm:$0xff]
    %v25 = vld [vmem:[%s1 + $0x30] sm:$0xff]
    %v26 = vld [vmem:[%s1 + $0x38] sm:$0xff]
    %v27 = vld [vmem:[%s1 + $0x40] sm:$0xff]
    %v28 = vld [vmem:[%s1 + $0x48] sm:$0xff]
    %v29 = vld [vmem:[%s1 + $0x50] sm:$0xff]
    %v30 = vld [vmem:[%s1 + $0x58] sm:$0xff]
    %v31 = vld [vmem:[%s1 + $0x60] sm:$0xff]
    %v32 = vld [vmem:[%s1 + $0x68] sm:$0xff]
    %v33 = vld [vmem:[%s1 + $0x70] sm:$0xff]
    %v34 = vld [vmem:[%s1 + $0x78] sm:$0xff]
    %v35 = vld [vmem:[%s1 + $0x80] sm:$0xff]
    %v36 = vld [vmem:[%s1 + $0x88] sm:$0xff]
    %v37 = vld [vmem:[%s1 + $0x90] sm:$0xff]
    %v38 = vld [vmem:[%s1 + $0x98] sm:$0xff]
    %v39 = vld [vmem:[%s1 + $0xa0] sm:$0xff]
    %v40 = vld [vmem:[%s1 + $0xa8] sm:$0xff]
    %v41 = vld [vmem:[%s1 + $0xb0] sm:$0xff]
    %v42 = vld [vmem:[%s1 + $0xb8] sm:$0xff]
    %v43 = vld [vmem:[%s1 + $0xc0] sm:$0xff]
    %v44 = vld [vmem:[%s1 + $0xc8] sm:$0xff]
    %v45 = vld [vmem:[%s1 + $0xd0] sm:$0xff]
    %v46 = vld [vmem:[%s1 + $0xd8] sm:$0xff]
    %v47 = vld [vmem:[%s1 + $0xe0] sm:$0xff]
    %v48 = vld [vmem:[%s1 + $0xe8] sm:$0xff]
    %v49 = vld [vmem:[%s1 + $0xf0] sm:$0xff]
    %v50 = vld [vmem:[%s1 + $0xf8] sm:$0xff]
    %v51 = vld [vmem:[%s2] sm:$0x1]
    %v53 = vlaneseq
    %v54 = vshrl.u32 %v53, 7
    %v55 = vsub.s32 0, %v54
    %v56 = vrot.slane %v51, %v55
    %58 = vmatprep.subr.mxu0 0.0
    %59 = vmatpush1.msra.mxu0 %v34
    %60 = vmatprep.subr.mxu0 0.0
    %61 = vmatpush1.msra.mxu0 %v33
    %62 = vmatprep.subr.mxu0 0.0
    %63 = vmatpush1.msra.mxu0 %v32
    %64 = vmatprep.subr.mxu0 0.0
    %65 = vmatpush1.msra.mxu0 %v31
    %66 = vmatprep.subr.mxu0 0.0
    %67 = vmatpush1.msra.mxu0 %v30
    %68 = vmatprep.subr.mxu0 0.0
    %69 = vmatpush1.msra.mxu0 %v29
    %70 = vmatprep.subr.mxu0 0.0
    %71 = vmatpush1.msra.mxu0 %v28
    %72 = vmatprep.subr.mxu0 0.0
    %73 = vmatpush1.msra.mxu0 %v27
    %74 = vmatprep.subr.mxu0 0.0
    %75 = vmatpush1.msra.mxu0 %v26
    %76 = vmatprep.subr.mxu0 0.0
    %77 = vmatpush1.msra.mxu0 %v25
    %78 = vmatprep.subr.mxu0 0.0
    %79 = vmatpush1.msra.mxu0 %v24
    %80 = vmatprep.subr.mxu0 0.0
    %81 = vmatpush1.msra.mxu0 %v23
    %82 = vmatprep.subr.mxu0 0.0
    %83 = vmatpush1.msra.mxu0 %v22
    %84 = vmatprep.subr.mxu0 0.0
    %85 = vmatpush1.msra.mxu0 %v21
    %86 = vmatprep.subr.mxu0 0.0
    %87 = vmatpush1.msra.mxu0 %v20
    %88 = vmatprep.subr.mxu0 0.0
    %89 = vmatpush1.msra.mxu0 %v19
    %90 = vmatprep.subr.mxu0 0.0
    %91 = vmatpush2.msra.mxu0 %v50
    %92 = vmatprep.subr.mxu0 0.0
    %93 = vmatpush2.msra.mxu0 %v49
    %94 = vmatprep.subr.mxu0 0.0
    %95 = vmatpush2.msra.mxu0 %v48
    %96 = vmatprep.subr.mxu0 0.0
    %97 = vmatpush2.msra.mxu0 %v47
    %98 = vmatprep.subr.mxu0 0.0
    %99 = vmatpush2.msra.mxu0 %v46
    %100 = vmatprep.subr.mxu0 0.0
    %101 = vmatpush2.msra.mxu0 %v45
    %102 = vmatprep.subr.mxu0 0.0
    %103 = vmatpush2.msra.mxu0 %v44
    %104 = vmatprep.subr.mxu0 0.0
    %105 = vmatpush2.msra.mxu0 %v43
    %106 = vmatprep.subr.mxu0 0.0
    %107 = vmatpush2.msra.mxu0 %v42
    %108 = vmatprep.subr.mxu0 0.0
    %109 = vmatpush2.msra.mxu0 %v41
    %110 = vmatprep.subr.mxu0 0.0
    %111 = vmatpush2.msra.mxu0 %v40
    %112 = vmatprep.subr.mxu0 0.0
    %113 = vmatpush2.msra.mxu0 %v39
    %114 = vmatprep.subr.mxu0 0.0
    %115 = vmatpush2.msra.mxu0 %v38
    %116 = vmatprep.subr.mxu0 0.0
    %117 = vmatpush2.msra.mxu0 %v37
    %118 = vmatprep.subr.mxu0 0.0
    %119 = vmatpush2.msra.mxu0 %v36
    %120 = vmatprep.subr.mxu0 0.0
    %121 = vmatpush2.msra.mxu0 %v35
    %122 = vmatprep.mubr.f32.mxu0 %v16
    %123 = vmatmul.mubr.f32.gmra.mxu0 %v15
    %v124 = vpop.f32.mrf.mxu0
    %v125 = vadd.f32 %v56, %v124
    %v126 = vpop.f32.mrf.mxu0
    %127 = vmatprep.mubr.f32.mxu0 %v18
    %128 = vmatmul.mubr.f32.gmra.mxu0 %v17
    %v129 = vpop.f32.mrf.mxu0
    %v130 = vadd.f32 %v56, %v129
    %v131 = vpop.f32.mrf.mxu0
    %132 = vdwg.mxu0
    %vm133 = vcmp.ge.f32.partialorder %v125, 0.0
    %vm134 = vcmp.ge.f32.partialorder %v130, 0.0
    %v135 = vmul.f32 %v125, 0.02
    %v136 = vmul.f32 %v130, 0.02
    %v137 = vsel %vm133, %v125, %v135
    %v138 = vsel %vm134, %v130, %v136
    %vm139 = vcmask 261120
    %140 = vst.msk [vmem:[#allocation2] sm:$0xff] %vm139, %v137
    %141 = vst.msk [vmem:[#allocation2 + $0x8] sm:$0xff] %vm139, %v138
    // Predicated region
    $region14: #{tpu_custom_call.1} parent=1 // pred_check
      _
    $region15: #{tpu_custom_call.1} parent=1 // pred_check_branch
      %143 = sbr.rel (0) target = $region17
    $region16: #{tpu_custom_call.1} parent=1 // pred_region
      %s145 = ssub.s32 256, 256
      %146 = vsyncadd [#allocation3], %s145
      %s147 = sshll.u32 [#allocation2], 4
      %s148 = int_to_ptr.vmem [resolvable:$true] %s147
      %153 = dma.vmem_to_hbm [thread:$0]  %s148, 256, %s3, [#allocation3], 128, 128, 8
    $region17: #{tpu_custom_call.1} parent=1 // pred_fallthru
      _
    // Predicated region
    $region18: #{tpu_custom_call.1} parent=1 // pred_check
      _
    $region19: #{tpu_custom_call.1} parent=1 // pred_check_branch
      %155 = sbr.rel (0) target = $region21
    $region20: #{tpu_custom_call.1} parent=1 // pred_region
      %156 = dma.done [#allocation3], 256
    $region21: #{tpu_custom_call.1} parent=1 // pred_fallthru
      _
    %157 = vsyncpa [#allocation3], 1

</llo_original>
